<compile_context>
chip_gen: v5e
topology: v5e:2x2
jax: 0.10.0
libtpu: 0.0.40
codegen_flags: <defaults>
</compile_context>

<pallas_src>
import functools

import jax
import jax.numpy as jnp
from jax.experimental import pallas as pl
from jax.experimental.pallas import tpu as pltpu

IN_FEATURES = 79
DROP_P = 0.3
BN_EPS = 1e-5


def _mlp_kernel(n_layers, batch, x_ref, *refs):
    """refs = (w0, b0, ..., w_{L-1}, b_{L-1}, mask_0, ..., mask_{L-3}, out_ref).

    All activations are (features, batch): batch on the 128-lane axis.
    """
    out_ref = refs[-1]
    wb = refs[: 2 * n_layers]
    masks = refs[2 * n_layers:-1]

    # Hoisted constants (not re-materialized per layer).
    inv_b = jnp.float32(1.0 / batch)
    eps = jnp.float32(BN_EPS)

    h = x_ref[...]                                        # (79, B) f32
    for i in range(n_layers):
        w = wb[2 * i][...]                                # (out_i, in_i)
        b = wb[2 * i + 1][...]                            # (out_i, 1)
        h = jnp.dot(w, h, preferred_element_type=jnp.float32) + b  # (out_i, B)

        if i < n_layers - 2:
            # BatchNorm1d (training, fresh params: gamma=1, beta=0, biased
            # variance, eps=1e-5).  Single pass: sum + sum-of-squares.
            s = jnp.sum(h, axis=1, keepdims=True)         # (out_i, 1)
            sq = jnp.sum(h * h, axis=1, keepdims=True)    # (out_i, 1)
            mean = s * inv_b
            var = jnp.maximum(sq * inv_b - mean * mean, 0.0)
            h = (h - mean) * jax.lax.rsqrt(var + eps)
            # ReLU
            h = jnp.maximum(h, 0.0)
            # Dropout(p=0.3): mask already holds {0, 1/(1-p)} -> one vmul.
            h = h * masks[i][...]
        elif i == n_layers - 2:
            h = jnp.tanh(h)

    out_ref[...] = h.astype(out_ref.dtype)


def init_params(key, hidden_layers):
    """PyTorch nn.Linear default init: U(-k, k), k = 1/sqrt(fan_in).

    Weights in PyTorch (out_features, in_features) layout; biases as
    (out_features, 1) columns (broadcast over the lane/batch axis in-kernel).
    """
    layer_sizes = [IN_FEATURES] + list(hidden_layers) + [1]
    params = []
    for i in range(len(layer_sizes) - 1):
        fan_in, fan_out = layer_sizes[i], layer_sizes[i + 1]
        key, kw, kb = jax.random.split(key, 3)
        bound = 1.0 / (fan_in ** 0.5)
        w = jax.random.uniform(kw, (fan_out, fan_in), jnp.float32, -bound, bound)
        b = jax.random.uniform(kb, (fan_out, 1), jnp.float32, -bound, bound)
        params.append((w, b))
    return params, layer_sizes


def make_dropout_masks(key, hidden_layers, batch, p=DROP_P):
    """Inverted-dropout keep masks, pre-scaled: values in {0, 1/(1-p)}.

    One mask per layer i < L-2 (layers followed by BN/ReLU/Dropout), already
    in the kernel's (features, batch) layout.
    """
    n_layers = len(hidden_layers) + 1
    n_masks = max(n_layers - 2, 0)
    scale = 1.0 / (1.0 - p)
    masks = []
    for width in hidden_layers[:n_masks]:
        key, k = jax.random.split(key)
        keep = jax.random.bernoulli(k, 1.0 - p, (width, batch))
        masks.append(keep.astype(jnp.float32) * scale)
    return masks


def nn_forward(x, params, dropout_masks):
    """Fused MLP forward.  x: (B, 79) f32  ->  (B, 1) f32."""
    n_layers = len(params)
    batch = x.shape[0]
    out_dim = params[-1][0].shape[0]

    # Layout plumbing (outside the kernel): put batch on the lane axis.
    x_t = x.T                                             # (79, B)

    tensor_inputs = [x_t]
    for w, b in params:
        tensor_inputs += [w, b]
    tensor_inputs += list(dropout_masks)

    # Full-array blocks, single grid step: whole problem is VMEM-resident and
    # training-mode BatchNorm sees the full batch (exact PyTorch numerics).
    in_specs = [pl.BlockSpec(t.shape, lambda i: (0, 0)) for t in tensor_inputs]
    out_specs = pl.BlockSpec((out_dim, batch), lambda i: (0, 0))

    kernel = functools.partial(_mlp_kernel, n_layers, batch)
    fn = pl.pallas_call(
        kernel,
        grid=(1,),
        in_specs=in_specs,
        out_specs=out_specs,
        out_shape=jax.ShapeDtypeStruct((out_dim, batch), jnp.float32),
        compiler_params=pltpu.CompilerParams(
            dimension_semantics=("arbitrary",),
        ),
    )
    y_t = fn(*tensor_inputs)                              # (1, B) lane-dense store
    return y_t.T                                          # (B, 1) PyTorch layout


if __name__ == "__main__":
    key = jax.random.PRNGKey(0)
    k_param, k_x, k_drop = jax.random.split(key, 3)

    hidden_layers = [32, 32]                              # NN(hidden_layers=[32, 32])
    params, layer_sizes = init_params(k_param, hidden_layers)

    batch = 128                                           # fills the 128-lane axis
    x = jax.random.normal(k_x, (batch, IN_FEATURES), dtype=jnp.float32)
    masks = make_dropout_masks(k_drop, hidden_layers, batch)

    out = nn_forward(x, params, masks)
    out = jax.block_until_ready(out)

    assert out.shape == (batch, 1), out.shape
    assert bool(jnp.all(jnp.isfinite(out)))
    print("KERNEL_OK")
</pallas_src>

<mosaic_0001>
module attributes {stable_mosaic.version = 11 : i64} {
  func.func @_mlp_kernel(%arg0: i32, %arg1: memref<79x128xf32, #tpu.memory_space<vmem>>, %arg2: memref<32x79xf32, #tpu.memory_space<vmem>>, %arg3: memref<32x1xf32, #tpu.memory_space<vmem>>, %arg4: memref<32x32xf32, #tpu.memory_space<vmem>>, %arg5: memref<32x1xf32, #tpu.memory_space<vmem>>, %arg6: memref<1x32xf32, #tpu.memory_space<vmem>>, %arg7: memref<1x1xf32, #tpu.memory_space<vmem>>, %arg8: memref<32x128xf32, #tpu.memory_space<vmem>>, %arg9: memref<1x128xf32, #tpu.memory_space<vmem>>) attributes {dimension_semantics = [#tpu.dimension_semantics<arbitrary>], iteration_bounds = array<i64: 1>, scalar_prefetch = 0 : i64, scratch_operands = 0 : i64, tpu.core_type = #tpu.core_type<tc>, window_params = [{pipeline_mode = #tpu.pipeline_mode<synchronous>, transform_indices = @transform_0, window_bounds = array<i64: 79, 128>}, {pipeline_mode = #tpu.pipeline_mode<synchronous>, transform_indices = @transform_1, window_bounds = array<i64: 32, 79>}, {pipeline_mode = #tpu.pipeline_mode<synchronous>, transform_indices = @transform_2, window_bounds = array<i64: 32, 1>}, {pipeline_mode = #tpu.pipeline_mode<synchronous>, transform_indices = @transform_3, window_bounds = array<i64: 32, 32>}, {pipeline_mode = #tpu.pipeline_mode<synchronous>, transform_indices = @transform_4, window_bounds = array<i64: 32, 1>}, {pipeline_mode = #tpu.pipeline_mode<synchronous>, transform_indices = @transform_5, window_bounds = array<i64: 1, 32>}, {pipeline_mode = #tpu.pipeline_mode<synchronous>, transform_indices = @transform_6, window_bounds = array<i64: 1, 1>}, {pipeline_mode = #tpu.pipeline_mode<synchronous>, transform_indices = @transform_7, window_bounds = array<i64: 32, 128>}, {pipeline_mode = #tpu.pipeline_mode<synchronous>, transform_indices = @transform_8, window_bounds = array<i64: 1, 128>}]} {
    %c0 = arith.constant 0 : index
    %c0_0 = arith.constant 0 : index
    %0 = vector.load %arg1[%c0, %c0_0] : memref<79x128xf32, #tpu.memory_space<vmem>>, vector<79x128xf32>
    %c0_1 = arith.constant 0 : index
    %c0_2 = arith.constant 0 : index
    %1 = vector.load %arg2[%c0_1, %c0_2] : memref<32x79xf32, #tpu.memory_space<vmem>>, vector<32x79xf32>
    %c0_3 = arith.constant 0 : index
    %c0_4 = arith.constant 0 : index
    %2 = vector.load %arg3[%c0_3, %c0_4] : memref<32x1xf32, #tpu.memory_space<vmem>>, vector<32x1xf32>
    %cst = arith.constant dense<0.000000e+00> : vector<32x128xf32>
    %3 = tpu.matmul %1, %0, %cst {dimension_numbers = #tpu.dot_dimension_numbers<[1], [0], [0], [1], [0, 0, 1, 1], [], []>} : vector<32x79xf32>, vector<79x128xf32>, vector<32x128xf32> -> vector<32x128xf32>
    %4 = vector.broadcast %2 : vector<32x1xf32> to vector<32x128xf32>
    %5 = arith.addf %3, %4 : vector<32x128xf32>
    %cst_5 = arith.constant dense<0.000000e+00> : vector<32xf32>
    %6 = vector.multi_reduction <add>, %5, %cst_5 [1] : vector<32x128xf32> to vector<32xf32>
    %7 = vector.shape_cast %6 : vector<32xf32> to vector<32x1xf32>
    %8 = arith.mulf %5, %5 : vector<32x128xf32>
    %cst_6 = arith.constant dense<0.000000e+00> : vector<32xf32>
    %9 = vector.multi_reduction <add>, %8, %cst_6 [1] : vector<32x128xf32> to vector<32xf32>
    %10 = vector.shape_cast %9 : vector<32xf32> to vector<32x1xf32>
    %cst_7 = arith.constant 7.812500e-03 : f32
    %11 = vector.broadcast %cst_7 : f32 to vector<32x1xf32>
    %12 = arith.mulf %7, %11 : vector<32x1xf32>
    %cst_8 = arith.constant 7.812500e-03 : f32
    %13 = vector.broadcast %cst_8 : f32 to vector<32x1xf32>
    %14 = arith.mulf %10, %13 : vector<32x1xf32>
    %15 = arith.mulf %12, %12 : vector<32x1xf32>
    %16 = arith.subf %14, %15 : vector<32x1xf32>
    %cst_9 = arith.constant 0.000000e+00 : f32
    %17 = vector.broadcast %cst_9 : f32 to vector<32x1xf32>
    %18 = arith.maximumf %16, %17 : vector<32x1xf32>
    %19 = vector.broadcast %12 : vector<32x1xf32> to vector<32x128xf32>
    %20 = arith.subf %5, %19 : vector<32x128xf32>
    %cst_10 = arith.constant 9.99999974E-6 : f32
    %21 = vector.broadcast %cst_10 : f32 to vector<32x1xf32>
    %22 = arith.addf %18, %21 : vector<32x1xf32>
    %23 = math.rsqrt %22 : vector<32x1xf32>
    %24 = vector.broadcast %23 : vector<32x1xf32> to vector<32x128xf32>
    %25 = arith.mulf %20, %24 : vector<32x128xf32>
    %cst_11 = arith.constant 0.000000e+00 : f32
    %26 = vector.broadcast %cst_11 : f32 to vector<32x128xf32>
    %27 = arith.maximumf %25, %26 : vector<32x128xf32>
    %c0_12 = arith.constant 0 : index
    %c0_13 = arith.constant 0 : index
    %28 = vector.load %arg8[%c0_12, %c0_13] : memref<32x128xf32, #tpu.memory_space<vmem>>, vector<32x128xf32>
    %29 = arith.mulf %27, %28 : vector<32x128xf32>
    %c0_14 = arith.constant 0 : index
    %c0_15 = arith.constant 0 : index
    %30 = vector.load %arg4[%c0_14, %c0_15] : memref<32x32xf32, #tpu.memory_space<vmem>>, vector<32x32xf32>
    %c0_16 = arith.constant 0 : index
    %c0_17 = arith.constant 0 : index
    %31 = vector.load %arg5[%c0_16, %c0_17] : memref<32x1xf32, #tpu.memory_space<vmem>>, vector<32x1xf32>
    %cst_18 = arith.constant dense<0.000000e+00> : vector<32x128xf32>
    %32 = tpu.matmul %30, %29, %cst_18 {dimension_numbers = #tpu.dot_dimension_numbers<[1], [0], [0], [1], [0, 0, 1, 1], [], []>} : vector<32x32xf32>, vector<32x128xf32>, vector<32x128xf32> -> vector<32x128xf32>
    %33 = vector.broadcast %31 : vector<32x1xf32> to vector<32x128xf32>
    %34 = arith.addf %32, %33 : vector<32x128xf32>
    %35 = math.tanh %34 : vector<32x128xf32>
    %c0_19 = arith.constant 0 : index
    %c0_20 = arith.constant 0 : index
    %36 = vector.load %arg6[%c0_19, %c0_20] : memref<1x32xf32, #tpu.memory_space<vmem>>, vector<1x32xf32>
    %c0_21 = arith.constant 0 : index
    %c0_22 = arith.constant 0 : index
    %37 = vector.load %arg7[%c0_21, %c0_22] : memref<1x1xf32, #tpu.memory_space<vmem>>, vector<1x1xf32>
    %cst_23 = arith.constant dense<0.000000e+00> : vector<1x128xf32>
    %38 = tpu.matmul %36, %35, %cst_23 {dimension_numbers = #tpu.dot_dimension_numbers<[1], [0], [0], [1], [0, 0, 1, 1], [], []>} : vector<1x32xf32>, vector<32x128xf32>, vector<1x128xf32> -> vector<1x128xf32>
    %39 = vector.broadcast %37 : vector<1x1xf32> to vector<1x128xf32>
    %40 = arith.addf %38, %39 : vector<1x128xf32>
    %c0_24 = arith.constant 0 : index
    %c0_25 = arith.constant 0 : index
    %41 = vector.load %arg9[%c0_24, %c0_25] : memref<1x128xf32, #tpu.memory_space<vmem>>, vector<1x128xf32>
    tpu.vector_store %arg9[%c0_24, %c0_25], %40 {strides = array<i32>} : memref<1x128xf32, #tpu.memory_space<vmem>>, vector<1x128xf32>,
    return
  }
  func.func @transform_0(%arg0: i32) -> (i32, i32) {
    %c0_i32 = arith.constant 0 : i32
    %c0_i32_0 = arith.constant 0 : i32
    %c0_i32_1 = arith.constant 0 : i32
    return %c0_i32, %c0_i32_0 : i32, i32
  }
  func.func @transform_1(%arg0: i32) -> (i32, i32) {
    %c0_i32 = arith.constant 0 : i32
    %c0_i32_0 = arith.constant 0 : i32
    %c0_i32_1 = arith.constant 0 : i32
    return %c0_i32, %c0_i32_0 : i32, i32
  }
  func.func @transform_2(%arg0: i32) -> (i32, i32) {
    %c0_i32 = arith.constant 0 : i32
    %c0_i32_0 = arith.constant 0 : i32
    %c0_i32_1 = arith.constant 0 : i32
    return %c0_i32, %c0_i32_0 : i32, i32
  }
  func.func @transform_3(%arg0: i32) -> (i32, i32) {
    %c0_i32 = arith.constant 0 : i32
    %c0_i32_0 = arith.constant 0 : i32
    %c0_i32_1 = arith.constant 0 : i32
    return %c0_i32, %c0_i32_0 : i32, i32
  }
  func.func @transform_4(%arg0: i32) -> (i32, i32) {
    %c0_i32 = arith.constant 0 : i32
    %c0_i32_0 = arith.constant 0 : i32
    %c0_i32_1 = arith.constant 0 : i32
    return %c0_i32, %c0_i32_0 : i32, i32
  }
  func.func @transform_5(%arg0: i32) -> (i32, i32) {
    %c0_i32 = arith.constant 0 : i32
    %c0_i32_0 = arith.constant 0 : i32
    %c0_i32_1 = arith.constant 0 : i32
    return %c0_i32, %c0_i32_0 : i32, i32
  }
  func.func @transform_6(%arg0: i32) -> (i32, i32) {
    %c0_i32 = arith.constant 0 : i32
    %c0_i32_0 = arith.constant 0 : i32
    %c0_i32_1 = arith.constant 0 : i32
    return %c0_i32, %c0_i32_0 : i32, i32
  }
  func.func @transform_7(%arg0: i32) -> (i32, i32) {
    %c0_i32 = arith.constant 0 : i32
    %c0_i32_0 = arith.constant 0 : i32
    %c0_i32_1 = arith.constant 0 : i32
    return %c0_i32, %c0_i32_0 : i32, i32
  }
  func.func @transform_8(%arg0: i32) -> (i32, i32) {
    %c0_i32 = arith.constant 0 : i32
    %c0_i32_0 = arith.constant 0 : i32
    %c0_i32_1 = arith.constant 0 : i32
    return %c0_i32, %c0_i32_0 : i32, i32
  }
}

</mosaic_0001>

<llo_original>
// kernel: tpu_custom_call.1
$region0: #{tpu_custom_call.1}
  #allocation0 [shape = 'u32[]', space=smem, size = 0x4, offset = 0x4, fixed_abs, tag = 'smem constant byte address 0x4 - core index']
  #allocation1 [shape = 'u32[72,128]{1,0:T(1,128)}', space=vmem, size = 0x9000, scoped, tag = 'internal scratch']
  #allocation2 [shape = 'f32[1,1]{1,0:T(1,128)S(1)}', space=vmem, size = 0x200, scoped, tag = 'scoped memory for tpu_custom_call.1']
  %s0 = inlined_call_operand.hbm [shape: f32[79,128], index: 0, kind: input, shape index: {}]
  %s1 = inlined_call_operand.vmem [shape: f32[32,79], index: 1, kind: input, shape index: {}]
  %s2 = inlined_call_operand.vmem [shape: f32[32,1], index: 2, kind: input, shape index: {}]
  %s3 = inlined_call_operand.vmem [shape: f32[32,32], index: 3, kind: input, shape index: {}]
  %s4 = inlined_call_operand.vmem [shape: f32[32,1], index: 4, kind: input, shape index: {}]
  %s5 = inlined_call_operand.vmem [shape: f32[1,32], index: 5, kind: input, shape index: {}]
  %s6 = inlined_call_operand.<no memory space> [shape: f32[1,1], index: 6, kind: input, shape index: {}]
  %s7 = inlined_call_operand.hbm [shape: f32[32,128], index: 7, kind: input, shape index: {}]
  %s8 = inlined_call_operand.hbm [shape: f32[1,128], index: 8, kind: output, shape index: {}]
  %s9 = sld [smem:[#allocation0]]
  $region50: #{tpu_custom_call.1} parent=0
    _
  %s11 = ssub.s32 1, %s9
  %s12 = scalar_select 0, %s11, %s9
  %v13 = vstv %s6
  %14 = vst [vmem:[#allocation2] sm:$0x1] %v13
  $region1: #{tpu_custom_call.1} parent=0
    #allocation3 [shape = 'u8[40960]{0}', space=vmem, size = 0xa000, scoped, tag = 'input window, operand 0, single buffered']
    #allocation4 [shape = 's32[1]{0}', space=sflag, size = 0x4, scoped, tag = 'scoped memory for tpu_custom_call.1']
    #allocation5 [shape = 's32[1]{0}', space=sflag, size = 0x4, scoped, tag = 'scoped memory for tpu_custom_call.1']
    #allocation6 [shape = 'u8[16384]{0}', space=vmem, size = 0x4000, scoped, tag = 'input window, operand 7, single buffered']
    #allocation7 [shape = 's32[1]{0}', space=sflag, size = 0x4, scoped, tag = 'scoped memory for tpu_custom_call.1']
    #allocation8 [shape = 'u8[512]{0}', space=vmem, size = 0x400, scoped, tag = 'output window, operand 0, single buffered']
    %15 = vsyncpa [#allocation4], 0
    %16 = vsyncpa [#allocation7], 0
    %17 = vsyncpa [#allocation5], 0
    // Predicated region
    $region2: #{tpu_custom_call.1} parent=1 // pred_check
      _
    $region3: #{tpu_custom_call.1} parent=1 // pred_check_branch
      %19 = sbr.rel (0) target = $region5
    $region4: #{tpu_custom_call.1} parent=1 // pred_region
      %21 = vsyncadd [#allocation4], 0
      %s22 = sshll.u32 %s0, 4
      %s23 = int_to_ptr.hbm [resolvable:$true] %s22
      %s24 = sshll.u32 [#allocation3], 4
      %s25 = int_to_ptr.vmem [resolvable:$true] %s24
      %30 = dma.hbm_to_vmem [thread:$0]  %s23, 1280, %s25, [#allocation4], 128, 128, 8
    $region5: #{tpu_custom_call.1} parent=1 // pred_fallthru
      _
    // Predicated region
    $region6: #{tpu_custom_call.1} parent=1 // pred_check
      _
    $region7: #{tpu_custom_call.1} parent=1 // pred_check_branch
      %32 = sbr.rel (0) target = $region9
    $region8: #{tpu_custom_call.1} parent=1 // pred_region
      _
    $region9: #{tpu_custom_call.1} parent=1 // pred_fallthru
      _
    // Predicated region
    $region10: #{tpu_custom_call.1} parent=1 // pred_check
      _
    $region11: #{tpu_custom_call.1} parent=1 // pred_check_branch
      %34 = sbr.rel (0) target = $region13
    $region12: #{tpu_custom_call.1} parent=1 // pred_region
      _
    $region13: #{tpu_custom_call.1} parent=1 // pred_fallthru
      _
    // Predicated region
    $region14: #{tpu_custom_call.1} parent=1 // pred_check
      _
    $region15: #{tpu_custom_call.1} parent=1 // pred_check_branch
      %36 = sbr.rel (0) target = $region17
    $region16: #{tpu_custom_call.1} parent=1 // pred_region
      _
    $region17: #{tpu_custom_call.1} parent=1 // pred_fallthru
      _
    // Predicated region
    $region18: #{tpu_custom_call.1} parent=1 // pred_check
      _
    $region19: #{tpu_custom_call.1} parent=1 // pred_check_branch
      %38 = sbr.rel (0) target = $region21
    $region20: #{tpu_custom_call.1} parent=1 // pred_region
      _
    $region21: #{tpu_custom_call.1} parent=1 // pred_fallthru
      _
    // Predicated region
    $region22: #{tpu_custom_call.1} parent=1 // pred_check
      _
    $region23: #{tpu_custom_call.1} parent=1 // pred_check_branch
      %40 = sbr.rel (0) target = $region25
    $region24: #{tpu_custom_call.1} parent=1 // pred_region
      _
    $region25: #{tpu_custom_call.1} parent=1 // pred_fallthru
      _
    // Predicated region
    $region26: #{tpu_custom_call.1} parent=1 // pred_check
      _
    $region27: #{tpu_custom_call.1} parent=1 // pred_check_branch
      %42 = sbr.rel (0) target = $region29
    $region28: #{tpu_custom_call.1} parent=1 // pred_region
      _
    $region29: #{tpu_custom_call.1} parent=1 // pred_fallthru
      _
    // Predicated region
    $region30: #{tpu_custom_call.1} parent=1 // pred_check
      _
    $region31: #{tpu_custom_call.1} parent=1 // pred_check_branch
      %44 = sbr.rel (0) target = $region33
    $region32: #{tpu_custom_call.1} parent=1 // pred_region
      %46 = vsyncadd [#allocation7], 0
      %s47 = sshll.u32 %s7, 4
      %s48 = int_to_ptr.hbm [resolvable:$true] %s47
      %s49 = sshll.u32 [#allocation6], 4
      %s50 = int_to_ptr.vmem [resolvable:$true] %s49
      %55 = dma.hbm_to_vmem [thread:$0]  %s48, 512, %s50, [#allocation7], 128, 128, 8
    $region33: #{tpu_custom_call.1} parent=1 // pred_fallthru
      _
    // Predicated region
    $region34: #{tpu_custom_call.1} parent=1 // pred_check
      _
    $region35: #{tpu_custom_call.1} parent=1 // pred_check_branch
      %57 = sbr.rel (0) target = $region37
    $region36: #{tpu_custom_call.1} parent=1 // pred_region
      %59 = dma.done [#allocation4], 1280
    $region37: #{tpu_custom_call.1} parent=1 // pred_fallthru
      _
    // Predicated region
    $region38: #{tpu_custom_call.1} parent=1 // pred_check
      _
    $region39: #{tpu_custom_call.1} parent=1 // pred_check_branch
      %61 = sbr.rel (0) target = $region41
    $region40: #{tpu_custom_call.1} parent=1 // pred_region
      %63 = dma.done [#allocation7], 512
    $region41: #{tpu_custom_call.1} parent=1 // pred_fallthru
      _
    %v64 = vld [vmem:[#allocation3] sm:$0xff]
    %v65 = vld [vmem:[#allocation3 + $0x8] sm:$0xff]
    %v66 = vld [vmem:[#allocation3 + $0x10] sm:$0xff]
    %v67 = vld [vmem:[#allocation3 + $0x18] sm:$0xff]
    %v68 = vld [vmem:[#allocation3 + $0x20] sm:$0xff]
    %v69 = vld [vmem:[#allocation3 + $0x28] sm:$0xff]
    %v70 = vld [vmem:[#allocation3 + $0x30] sm:$0xff]
    %v71 = vld [vmem:[#allocation3 + $0x38] sm:$0xff]
    %v72 = vld [vmem:[#allocation3 + $0x40] sm:$0xff]
    %v73 = vld [vmem:[#allocation3 + $0x48] sm:$0x7f]
    %v74 = vld [vmem:[%s1] sm:$0xff]
    %v75 = vld [vmem:[%s1 + $0x8] sm:$0xff]
    %v76 = vld [vmem:[%s1 + $0x10] sm:$0xff]
    %v77 = vld [vmem:[%s1 + $0x18] sm:$0xff]
    %v78 = vld [vmem:[%s2] sm:$0xff]
    %v79 = vld [vmem:[%s2 + $0x8] sm:$0xff]
    %v80 = vld [vmem:[%s2 + $0x10] sm:$0xff]
    %v81 = vld [vmem:[%s2 + $0x18] sm:$0xff]
    %83 = vset.pattern.permute.xlu0 0
    %84 = vperm.xlu0 %83, %v78
    %v85 = vpop.permute.xlu0 %84
    %88 = vset.pattern.permute.xlu0 0
    %89 = vperm.xlu0 %88, %v79
    %v90 = vpop.permute.xlu0 %89
    %93 = vset.pattern.permute.xlu0 0
    %94 = vperm.xlu0 %93, %v80
    %v95 = vpop.permute.xlu0 %94
    %98 = vset.pattern.permute.xlu0 0
    %99 = vperm.xlu0 %98, %v81
    %v100 = vpop.permute.xlu0 %99
    %vm102 = vcmask 646144
    %v104 = vsel %vm102, %v74, 0
    %v107 = vsel %vm102, %v75, 0
    %v110 = vsel %vm102, %v76, 0
    %v113 = vsel %vm102, %v77, 0
    %vm115 = vcmask 1046528
    %v117 = vsel %vm115, %v73, 0
    %119 = vmatpush.msra.mxu0 0.0
    %120 = vmatpush.msra.mxu0 0.0
    %121 = vmatpush.msra.mxu0 0.0
    %122 = vmatpush.msra.mxu0 0.0
    %123 = vmatpush.msra.mxu0 0.0
    %124 = vmatpush.msra.mxu0 0.0
    %125 = vmatpush.msra.mxu0 %v117
    %126 = vmatpush.msra.mxu0 %v72
    %127 = vmatpush.msra.mxu0 %v71
    %128 = vmatpush.msra.mxu0 %v70
    %129 = vmatpush.msra.mxu0 %v69
    %130 = vmatpush.msra.mxu0 %v68
    %131 = vmatpush.msra.mxu0 %v67
    %132 = vmatpush.msra.mxu0 %v66
    %133 = vmatpush.msra.mxu0 %v65
    %134 = vmatpush.msra.mxu0 %v64
    %135 = vmatmul.f32.gmra.mxu0 %v104
    %v136 = vpop.f32.mrf.mxu0
    %v137 = vadd.f32 %v85, %v136
    %138 = vmatmul.f32.gmra.mxu0 %v107
    %v139 = vpop.f32.mrf.mxu0
    %v140 = vadd.f32 %v90, %v139
    %141 = vmatmul.f32.gmra.mxu0 %v110
    %v142 = vpop.f32.mrf.mxu0
    %v143 = vadd.f32 %v95, %v142
    %144 = vmatmul.f32.gmra.mxu0 %v113
    %v145 = vpop.f32.mrf.mxu0
    %v146 = vadd.f32 %v100, %v145
    %147 = vdwg.mxu0
    %148 = vadd.xlane.f32.xlu0 %v137
    %v149 = vpop.xlane.xlu0 %148
    %150 = vadd.xlane.f32.xlu0 %v140
    %v151 = vpop.xlane.xlu0 %150
    %152 = vadd.xlane.f32.xlu0 %v143
    %v153 = vpop.xlane.xlu0 %152
    %154 = vadd.xlane.f32.xlu0 %v146
    %v155 = vpop.xlane.xlu0 %154
    %v156 = vmul.f32 %v137, %v137
    %v157 = vmul.f32 %v140, %v140
    %v158 = vmul.f32 %v143, %v143
    %v159 = vmul.f32 %v146, %v146
    %160 = vadd.xlane.f32.xlu0 %v156
    %v161 = vpop.xlane.xlu0 %160
    %162 = vadd.xlane.f32.xlu0 %v157
    %v163 = vpop.xlane.xlu0 %162
    %164 = vadd.xlane.f32.xlu0 %v158
    %v165 = vpop.xlane.xlu0 %164
    %166 = vadd.xlane.f32.xlu0 %v159
    %v167 = vpop.xlane.xlu0 %166
    %v168 = vmul.f32 %v149, 0.0078125
    %v169 = vmul.f32 %v151, 0.0078125
    %v170 = vmul.f32 %v153, 0.0078125
    %v171 = vmul.f32 %v155, 0.0078125
    %v172 = vmul.f32 %v161, 0.0078125
    %v173 = vmul.f32 %v163, 0.0078125
    %v174 = vmul.f32 %v165, 0.0078125
    %v175 = vmul.f32 %v167, 0.0078125
    %v176 = vmul.f32 %v168, %v168
    %v177 = vmul.f32 %v169, %v169
    %v178 = vmul.f32 %v170, %v170
    %v179 = vmul.f32 %v171, %v171
    %v180 = vsub.f32 %v172, %v176
    %v181 = vsub.f32 %v173, %v177
    %v182 = vsub.f32 %v174, %v178
    %v183 = vsub.f32 %v175, %v179
    %v184 = vmax.f32 %v180, 0.0
    %v185 = vmax.f32 %v181, 0.0
    %v186 = vmax.f32 %v182, 0.0
    %v187 = vmax.f32 %v183, 0.0
    %v188 = vsub.f32 %v137, %v168
    %v189 = vsub.f32 %v140, %v169
    %v190 = vsub.f32 %v143, %v170
    %v191 = vsub.f32 %v146, %v171
    %v192 = vadd.f32 %v184, 1e-05
    %v193 = vadd.f32 %v185, 1e-05
    %v194 = vadd.f32 %v186, 1e-05
    %v195 = vadd.f32 %v187, 1e-05
    %v196 = vrsqrt.pop %v192
    %v197 = vmul.f32 %v196, %v192
    %v198 = vmul.f32 %v197, %v196
    %v199 = vmul.f32 0.5, %v198
    %v200 = vsub.f32 1.5, %v199
    %v201 = vmul.f32 %v196, %v200
    %vm202 = vweird.f32 %v192
    %vm203 = vweird.f32 %v196
    %vm204 = vmor %vm202, %vm203
    %v205 = vsel %vm204, %v196, %v201
    %v206 = vrsqrt.pop %v193
    %v207 = vmul.f32 %v206, %v193
    %v208 = vmul.f32 %v207, %v206
    %v209 = vmul.f32 0.5, %v208
    %v210 = vsub.f32 1.5, %v209
    %v211 = vmul.f32 %v206, %v210
    %vm212 = vweird.f32 %v193
    %vm213 = vweird.f32 %v206
    %vm214 = vmor %vm212, %vm213
    %v215 = vsel %vm214, %v206, %v211
    %v216 = vrsqrt.pop %v194
    %v217 = vmul.f32 %v216, %v194
    %v218 = vmul.f32 %v217, %v216
    %v219 = vmul.f32 0.5, %v218
    %v220 = vsub.f32 1.5, %v219
    %v221 = vmul.f32 %v216, %v220
    %vm222 = vweird.f32 %v194
    %vm223 = vweird.f32 %v216
    %vm224 = vmor %vm222, %vm223
    %v225 = vsel %vm224, %v216, %v221
    %v226 = vrsqrt.pop %v195
    %v227 = vmul.f32 %v226, %v195
    %v228 = vmul.f32 %v227, %v226
    %v229 = vmul.f32 0.5, %v228
    %v230 = vsub.f32 1.5, %v229
    %v231 = vmul.f32 %v226, %v230
    %vm232 = vweird.f32 %v195
    %vm233 = vweird.f32 %v226
    %vm234 = vmor %vm232, %vm233
    %v235 = vsel %vm234, %v226, %v231
    %v236 = vmul.f32 %v188, %v205
    %v237 = vmul.f32 %v189, %v215
    %v238 = vmul.f32 %v190, %v225
    %v239 = vmul.f32 %v191, %v235
    %v240 = vmax.f32 %v236, 0.0
    %v241 = vmax.f32 %v237, 0.0
    %v242 = vmax.f32 %v238, 0.0
    %v243 = vmax.f32 %v239, 0.0
    %v244 = vld [vmem:[#allocation6] sm:$0xff]
    %v245 = vld [vmem:[#allocation6 + $0x8] sm:$0xff]
    %v246 = vld [vmem:[#allocation6 + $0x10] sm:$0xff]
    %v247 = vld [vmem:[#allocation6 + $0x18] sm:$0xff]
    %v248 = vmul.f32 %v240, %v244
    %v249 = vmul.f32 %v241, %v245
    %v250 = vmul.f32 %v242, %v246
    %v251 = vmul.f32 %v243, %v247
    %v252 = vld [vmem:[%s3] sm:$0xff]
    %v253 = vld [vmem:[%s3 + $0x8] sm:$0xff]
    %v254 = vld [vmem:[%s3 + $0x10] sm:$0xff]
    %v255 = vld [vmem:[%s3 + $0x18] sm:$0xff]
    %v256 = vld [vmem:[%s4] sm:$0xff]
    %v257 = vld [vmem:[%s4 + $0x8] sm:$0xff]
    %v258 = vld [vmem:[%s4 + $0x10] sm:$0xff]
    %v259 = vld [vmem:[%s4 + $0x18] sm:$0xff]
    %261 = vset.pattern.permute.xlu0 0
    %262 = vperm.xlu0 %261, %v256
    %v263 = vpop.permute.xlu0 %262
    %266 = vset.pattern.permute.xlu0 0
    %267 = vperm.xlu0 %266, %v257
    %v268 = vpop.permute.xlu0 %267
    %271 = vset.pattern.permute.xlu0 0
    %272 = vperm.xlu0 %271, %v258
    %v273 = vpop.permute.xlu0 %272
    %276 = vset.pattern.permute.xlu0 0
    %277 = vperm.xlu0 %276, %v259
    %v278 = vpop.permute.xlu0 %277
    %vm280 = vcmask 261120
    %v282 = vsel %vm280, %v252, 0
    %v285 = vsel %vm280, %v253, 0
    %v288 = vsel %vm280, %v254, 0
    %v291 = vsel %vm280, %v255, 0
    %293 = vmatpush.msra.mxu0 0.0
    %294 = vmatpush.msra.mxu0 0.0
    %295 = vmatpush.msra.mxu0 0.0
    %296 = vmatpush.msra.mxu0 0.0
    %297 = vmatpush.msra.mxu0 0.0
    %298 = vmatpush.msra.mxu0 0.0
    %299 = vmatpush.msra.mxu0 0.0
    %300 = vmatpush.msra.mxu0 0.0
    %301 = vmatpush.msra.mxu0 0.0
    %302 = vmatpush.msra.mxu0 0.0
    %303 = vmatpush.msra.mxu0 0.0
    %304 = vmatpush.msra.mxu0 0.0
    %305 = vmatpush.msra.mxu0 %v251
    %306 = vmatpush.msra.mxu0 %v250
    %307 = vmatpush.msra.mxu0 %v249
    %308 = vmatpush.msra.mxu0 %v248
    %309 = vmatmul.f32.gmra.mxu0 %v282
    %v310 = vpop.f32.mrf.mxu0
    %v311 = vadd.f32 %v263, %v310
    %312 = vmatmul.f32.gmra.mxu0 %v285
    %v313 = vpop.f32.mrf.mxu0
    %v314 = vadd.f32 %v268, %v313
    %315 = vmatmul.f32.gmra.mxu0 %v288
    %v316 = vpop.f32.mrf.mxu0
    %v317 = vadd.f32 %v273, %v316
    %318 = vmatmul.f32.gmra.mxu0 %v291
    %v319 = vpop.f32.mrf.mxu0
    %v320 = vadd.f32 %v278, %v319
    %321 = vdwg.mxu0
    %v322 = vtanh.pop %v311
    %v323 = vtanh.pop %v314
    %v324 = vtanh.pop %v317
    %v325 = vtanh.pop %v320
    %v326 = vld [vmem:[%s5] sm:$0x1]
    %v327 = vld [vmem:[#allocation2] sm:$0x1]
    %329 = vset.pattern.permute.xlu0 0
    %330 = vperm.xlu0 %329, %v327
    %v331 = vpop.permute.xlu0 %330
    %v333 = vperm.slane %v331, 0
    %v335 = vsel %vm280, %v326, 0
    %337 = vmatpush.msra.mxu0 0.0
    %338 = vmatpush.msra.mxu0 0.0
    %339 = vmatpush.msra.mxu0 0.0
    %340 = vmatpush.msra.mxu0 0.0
    %341 = vmatpush.msra.mxu0 0.0
    %342 = vmatpush.msra.mxu0 0.0
    %343 = vmatpush.msra.mxu0 0.0
    %344 = vmatpush.msra.mxu0 0.0
    %345 = vmatpush.msra.mxu0 0.0
    %346 = vmatpush.msra.mxu0 0.0
    %347 = vmatpush.msra.mxu0 0.0
    %348 = vmatpush.msra.mxu0 0.0
    %349 = vmatpush.msra.mxu0 %v325
    %350 = vmatpush.msra.mxu0 %v324
    %351 = vmatpush.msra.mxu0 %v323
    %352 = vmatpush.msra.mxu0 %v322
    %353 = vmatmul.f32.gmra.mxu0 %v335
    %v354 = vpop.f32.mrf.mxu0
    %v355 = vadd.f32 %v333, %v354
    %356 = vdwg.mxu0
    %357 = vst [vmem:[#allocation8] sm:$0x1] %v355
    // Predicated region
    $region42: #{tpu_custom_call.1} parent=1 // pred_check
      _
    $region43: #{tpu_custom_call.1} parent=1 // pred_check_branch
      %359 = sbr.rel (0) target = $region45
    $region44: #{tpu_custom_call.1} parent=1 // pred_region
      %361 = vsyncadd [#allocation5], 0
      %s363 = sshll.u32 [#allocation8], 4
      %s364 = int_to_ptr.vmem [resolvable:$true] %s363
      %s365 = sshll.u32 %s8, 4
      %s366 = int_to_ptr.hbm [resolvable:$true] %s365
      %368 = dma.vmem_to_hbm [thread:$0]  %s364, 16, %s366, [#allocation5]
    $region45: #{tpu_custom_call.1} parent=1 // pred_fallthru
      _
    // Predicated region
    $region46: #{tpu_custom_call.1} parent=1 // pred_check
      _
    $region47: #{tpu_custom_call.1} parent=1 // pred_check_branch
      %370 = sbr.rel (0) target = $region49
    $region48: #{tpu_custom_call.1} parent=1 // pred_region
      %372 = dma.done [#allocation5], 16
    $region49: #{tpu_custom_call.1} parent=1 // pred_fallthru
      _
    %373 = vsyncpa [#allocation4], 1
    %374 = vsyncpa [#allocation7], 1
    %375 = vsyncpa [#allocation5], 1

</llo_original>
